<compile_context>
chip_gen: v5e
topology: v5e:2x2
jax: 0.10.0
libtpu: 0.0.40
codegen_flags: <defaults>
</compile_context>

<pallas_src>
import functools

import jax
import jax.numpy as jnp
from jax import lax
from jax.experimental import pallas as pl
from jax.experimental.pallas import tpu as pltpu

# Module-level flags mirroring the PyTorch script.
ACTIVATION_FUNCTION = True
BIAS = False  # nn.Linear(in_size, out_size, bias=False)


def _round_up(x: int, m: int) -> int:
    return ((x + m - 1) // m) * m


def _pick_tiles(M: int, K: int, N: int):
    """(8,128)-aligned tiles, VMEM-friendly on v5e/v6e/v7x. Prefer a K tile that
    covers K in a single step (no accumulator) when that keeps tiles small."""
    tm = min(_round_up(M, 8), 256)
    k_aligned = _round_up(K, 128)
    tk = k_aligned if k_aligned <= 1024 else 512
    tn = min(_round_up(N, 128), 256)
    return tm, tk, tn


def _dot_t(x, w):
    # x: (m, k), w: (n, k) -- contract K with K (PyTorch Linear layout, no transpose).
    return lax.dot_general(
        x, w,
        dimension_numbers=(((1,), (1,)), ((), ())),
        preferred_element_type=jnp.float32,
    )


# ----------------------------- kernels ---------------------------------------

def _make_small_kernel(apply_sigmoid: bool):
    """Whole problem in one block: matmul + sigmoid, direct write."""
    def kernel(x_ref, w_ref, o_ref):
        y = _dot_t(x_ref[...], w_ref[...])
        if apply_sigmoid:
            y = jax.nn.sigmoid(y)
        o_ref[...] = y.astype(o_ref.dtype)
    return kernel


def _make_tiled_kernel_single_k(apply_sigmoid: bool):
    """2-D grid (M, N): K fits in one tile, no accumulator scratch needed."""
    def kernel(x_ref, w_ref, o_ref):
        y = _dot_t(x_ref[...], w_ref[...])
        if apply_sigmoid:
            y = jax.nn.sigmoid(y)
        o_ref[...] = y.astype(o_ref.dtype)
    return kernel


def _make_tiled_kernel_multi_k(apply_sigmoid: bool):
    """3-D grid (M, N, K): f32 accumulator scratch, init/finalize via pl.when."""
    def kernel(x_ref, w_ref, o_ref, acc_ref):
        @pl.when(pl.program_id(2) == 0)
        def _init():
            acc_ref[...] = jnp.zeros_like(acc_ref)

        acc_ref[...] += _dot_t(x_ref[...], w_ref[...])

        @pl.when(pl.program_id(2) == pl.num_programs(2) - 1)
        def _finalize():
            y = acc_ref[...]
            if apply_sigmoid:
                y = jax.nn.sigmoid(y)
            o_ref[...] = y.astype(o_ref.dtype)
    return kernel


# ----------------------------- pallas_call builders ---------------------------

def _cost(M, K, N, activation, in_itemsize, out_itemsize):
    return pl.CostEstimate(
        flops=2 * M * N * K,
        transcendentals=(M * N) if activation else 0,
        bytes_accessed=(M * K + N * K) * in_itemsize + M * N * out_itemsize,
    )


def _fcl_small(xc, wc, out_dtype, activation):
    B, K = xc.shape
    N = wc.shape[0]
    return pl.pallas_call(
        _make_small_kernel(activation),
        out_shape=jax.ShapeDtypeStruct((B, N), out_dtype),
        grid_spec=pltpu.PrefetchScalarGridSpec(
            num_scalar_prefetch=0,
            grid=(1,),
            in_specs=[
                pl.BlockSpec((B, K), lambda i: (0, 0)),   # x  (full block)
                pl.BlockSpec((N, K), lambda i: (0, 0)),   # W  (out, in) full block
            ],
            out_specs=pl.BlockSpec((B, N), lambda i: (0, 0)),
        ),
        compiler_params=pltpu.CompilerParams(
            dimension_semantics=("arbitrary",),
        ),
        cost_estimate=_cost(B, K, N, activation,
                            jnp.dtype(xc.dtype).itemsize,
                            jnp.dtype(out_dtype).itemsize),
    )(xc, wc)


def _fcl_tiled(xc, wc, out_dtype, activation, tm, tk, tn):
    Mp, Kp = xc.shape
    Np = wc.shape[0]
    kt = Kp // tk
    cost = _cost(Mp, Kp, Np, activation,
                 jnp.dtype(xc.dtype).itemsize, jnp.dtype(out_dtype).itemsize)

    if kt == 1:
        grid_spec = pltpu.PrefetchScalarGridSpec(
            num_scalar_prefetch=0,
            grid=(Mp // tm, Np // tn),
            in_specs=[
                pl.BlockSpec((tm, tk), lambda i, j: (i, 0)),
                pl.BlockSpec((tn, tk), lambda i, j: (j, 0)),
            ],
            out_specs=pl.BlockSpec((tm, tn), lambda i, j: (i, j)),
        )
        kernel = _make_tiled_kernel_single_k(activation)
        semantics = ("parallel", "parallel")
    else:
        grid_spec = pltpu.PrefetchScalarGridSpec(
            num_scalar_prefetch=0,
            grid=(Mp // tm, Np // tn, kt),
            in_specs=[
                pl.BlockSpec((tm, tk), lambda i, j, k: (i, k)),
                pl.BlockSpec((tn, tk), lambda i, j, k: (j, k)),
            ],
            out_specs=pl.BlockSpec((tm, tn), lambda i, j, k: (i, j)),
            scratch_shapes=[pltpu.VMEM((tm, tn), jnp.float32)],
        )
        kernel = _make_tiled_kernel_multi_k(activation)
        semantics = ("parallel", "parallel", "arbitrary")

    return pl.pallas_call(
        kernel,
        out_shape=jax.ShapeDtypeStruct((Mp, Np), out_dtype),
        grid_spec=grid_spec,
        compiler_params=pltpu.CompilerParams(dimension_semantics=semantics),
        cost_estimate=cost,
    )(xc, wc)


# ----------------------------- public forward --------------------------------

@functools.partial(jax.jit, static_argnames=("activation", "compute_dtype"))
def fcl_forward(x, weight, *, activation=ACTIVATION_FUNCTION,
                compute_dtype=jnp.bfloat16):
    """x: (B, in_size); weight: (out_size, in_size) -- PyTorch Linear layout."""
    B, K = x.shape
    N, K2 = weight.shape
    assert K == K2, "weight must be (out_size, in_size)"
    out_dtype = x.dtype

    xc = x.astype(compute_dtype)
    wc = weight.astype(compute_dtype)

    # Fast path: whole problem in one VMEM block, no padding / slicing.
    if B <= 256 and N <= 256 and K <= 1024:
        return _fcl_small(xc, wc, out_dtype, activation)

    tm, tk, tn = _pick_tiles(B, K, N)
    Mp, Kp, Np = _round_up(B, tm), _round_up(K, tk), _round_up(N, tn)
    if (Mp, Kp) != (B, K):
        xc = jnp.pad(xc, ((0, Mp - B), (0, Kp - K)))
    if (Np, Kp) != (N, K):
        wc = jnp.pad(wc, ((0, Np - N), (0, Kp - K)))

    out_p = _fcl_tiled(xc, wc, out_dtype, activation, tm, tk, tn)
    if (Mp, Np) != (B, N):
        out_p = out_p[:B, :N]
    return out_p


# ----------------------------- demo / self-test -------------------------------

def _ref_forward(x, weight, activation, op_dtype):
    y = jnp.dot(x.astype(op_dtype), weight.astype(op_dtype).T,
                preferred_element_type=jnp.float32)
    if activation:
        y = jax.nn.sigmoid(y)
    return y


if __name__ == "__main__":
    key = jax.random.PRNGKey(0)
    k_x, k_w, k_x2, k_w2 = jax.random.split(key, 4)

    # --- Small-shape demo (matches the FCL module: batch=8, in=32, out=16) ---
    batch, in_size, out_size = 8, 32, 16
    x = jax.random.normal(k_x, (batch, in_size), dtype=jnp.float32)
    bound = 1.0 / jnp.sqrt(jnp.float32(in_size))
    weight = jax.random.uniform(
        k_w, (out_size, in_size), dtype=jnp.float32, minval=-bound, maxval=bound
    )

    out_bf16 = jax.block_until_ready(fcl_forward(x, weight))
    ref_f32 = _ref_forward(x, weight, ACTIVATION_FUNCTION, jnp.float32)
    ref_bf16 = _ref_forward(x, weight, ACTIVATION_FUNCTION, jnp.bfloat16)

    assert out_bf16.shape == (batch, out_size)
    assert jnp.allclose(out_bf16, ref_bf16, atol=1e-5, rtol=1e-5), "small bf16 mismatch"
    assert jnp.allclose(out_bf16, ref_f32, atol=2e-2, rtol=2e-2), "small f32-ref mismatch"

    out_f32 = jax.block_until_ready(fcl_forward(x, weight, compute_dtype=jnp.float32))
    assert jnp.allclose(out_f32, ref_f32, atol=1e-4, rtol=1e-4), "small f32-path mismatch"

    # --- Larger, misaligned shapes: exercise the tiled multi-K accumulator path ---
    B2, K2, N2 = 260, 1536, 384   # pads M and N, 3 K-steps with tk=512
    x2 = jax.random.normal(k_x2, (B2, K2), dtype=jnp.float32)
    bound2 = 1.0 / jnp.sqrt(jnp.float32(K2))
    w2 = jax.random.uniform(
        k_w2, (N2, K2), dtype=jnp.float32, minval=-bound2, maxval=bound2
    )

    out2 = jax.block_until_ready(fcl_forward(x2, w2))
    ref2_bf16 = _ref_forward(x2, w2, ACTIVATION_FUNCTION, jnp.bfloat16)
    ref2_f32 = _ref_forward(x2, w2, ACTIVATION_FUNCTION, jnp.float32)
    assert out2.shape == (B2, N2)
    assert jnp.allclose(out2, ref2_bf16, atol=1e-3, rtol=1e-3), "tiled bf16 mismatch"
    assert jnp.allclose(out2, ref2_f32, atol=3e-2, rtol=3e-2), "tiled f32-ref mismatch"

    out2_f32 = jax.block_until_ready(fcl_forward(x2, w2, compute_dtype=jnp.float32))
    assert jnp.allclose(out2_f32, ref2_f32, atol=1e-4, rtol=1e-4), "tiled f32-path mismatch"

    print("KERNEL_OK")
</pallas_src>

<mosaic_0001>
module attributes {stable_mosaic.version = 11 : i64} {
  func.func @kernel(%arg0: i32, %arg1: memref<8x32xbf16, #tpu.memory_space<vmem>>, %arg2: memref<16x32xbf16, #tpu.memory_space<vmem>>, %arg3: memref<8x16xf32, #tpu.memory_space<vmem>>) attributes {dimension_semantics = [#tpu.dimension_semantics<arbitrary>], iteration_bounds = array<i64: 1>, scalar_prefetch = 0 : i64, scratch_operands = 0 : i64, tpu.core_type = #tpu.core_type<tc>, window_params = [{pipeline_mode = #tpu.pipeline_mode<synchronous>, transform_indices = @transform_0, window_bounds = array<i64: 8, 32>}, {pipeline_mode = #tpu.pipeline_mode<synchronous>, transform_indices = @transform_1, window_bounds = array<i64: 16, 32>}, {pipeline_mode = #tpu.pipeline_mode<synchronous>, transform_indices = @transform_2, window_bounds = array<i64: 8, 16>}]} {
    %c0 = arith.constant 0 : index
    %c0_0 = arith.constant 0 : index
    %0 = vector.load %arg1[%c0, %c0_0] : memref<8x32xbf16, #tpu.memory_space<vmem>>, vector<8x32xbf16>
    %c0_1 = arith.constant 0 : index
    %c0_2 = arith.constant 0 : index
    %1 = vector.load %arg2[%c0_1, %c0_2] : memref<16x32xbf16, #tpu.memory_space<vmem>>, vector<16x32xbf16>
    %cst = arith.constant dense<0.000000e+00> : vector<8x16xf32>
    %2 = tpu.matmul %0, %1, %cst {dimension_numbers = #tpu.dot_dimension_numbers<[1], [1], [0], [0], [0, 0, 1, 0], [], []>} : vector<8x32xbf16>, vector<16x32xbf16>, vector<8x16xf32> -> vector<8x16xf32>
    %3 = arith.negf %2 : vector<8x16xf32>
    %4 = math.exp %3 : vector<8x16xf32>
    %cst_3 = arith.constant 1.000000e+00 : f32
    %5 = vector.broadcast %cst_3 : f32 to vector<8x16xf32>
    %6 = arith.addf %5, %4 : vector<8x16xf32>
    %7 = arith.divf %5, %6 : vector<8x16xf32>
    %c0_4 = arith.constant 0 : index
    %c0_5 = arith.constant 0 : index
    %8 = vector.load %arg3[%c0_4, %c0_5] : memref<8x16xf32, #tpu.memory_space<vmem>>, vector<8x16xf32>
    tpu.vector_store %arg3[%c0_4, %c0_5], %7 {strides = array<i32>} : memref<8x16xf32, #tpu.memory_space<vmem>>, vector<8x16xf32>,
    return
  }
  func.func @transform_0(%arg0: i32) -> (i32, i32) {
    %c0_i32 = arith.constant 0 : i32
    %c0_i32_0 = arith.constant 0 : i32
    %c0_i32_1 = arith.constant 0 : i32
    return %c0_i32, %c0_i32_0 : i32, i32
  }
  func.func @transform_1(%arg0: i32) -> (i32, i32) {
    %c0_i32 = arith.constant 0 : i32
    %c0_i32_0 = arith.constant 0 : i32
    %c0_i32_1 = arith.constant 0 : i32
    return %c0_i32, %c0_i32_0 : i32, i32
  }
  func.func @transform_2(%arg0: i32) -> (i32, i32) {
    %c0_i32 = arith.constant 0 : i32
    %c0_i32_0 = arith.constant 0 : i32
    %c0_i32_1 = arith.constant 0 : i32
    return %c0_i32, %c0_i32_0 : i32, i32
  }
}

</mosaic_0001>

<llo_original>
// kernel: fcl_forward.1
$region0: #{fcl_forward.1}
  #allocation0 [shape = 'u32[]', space=smem, size = 0x4, offset = 0x4, fixed_abs, tag = 'smem constant byte address 0x4 - core index']
  #allocation1 [shape = 'u32[72,128]{1,0:T(1,128)}', space=vmem, size = 0x9000, scoped, tag = 'internal scratch']
  %s0 = inlined_call_operand.vmem [shape: bf16[8,32], index: 0, kind: input, shape index: {}]
  %s1 = inlined_call_operand.vmem [shape: bf16[16,32], index: 1, kind: input, shape index: {}]
  %s2 = inlined_call_operand.hbm [shape: f32[8,16], index: 2, kind: output, shape index: {}]
  %s3 = sld [smem:[#allocation0]]
  $region18: #{fcl_forward.1} parent=0
    _
  %s5 = ssub.s32 1, %s3
  %s6 = scalar_select 0, %s5, %s3
  $region1: #{fcl_forward.1} parent=0
    #allocation2 [shape = 'u8[4096]{0}', space=vmem, size = 0x1000, scoped, tag = 'output window, operand 0, single buffered']
    #allocation3 [shape = 's32[1]{0}', space=sflag, size = 0x4, scoped, tag = 'scoped memory for fcl_forward.1']
    %7 = vsyncpa [#allocation3], 0
    // Predicated region
    $region2: #{fcl_forward.1} parent=1 // pred_check
      _
    $region3: #{fcl_forward.1} parent=1 // pred_check_branch
      %9 = sbr.rel (0) target = $region5
    $region4: #{fcl_forward.1} parent=1 // pred_region
      _
    $region5: #{fcl_forward.1} parent=1 // pred_fallthru
      _
    // Predicated region
    $region6: #{fcl_forward.1} parent=1 // pred_check
      _
    $region7: #{fcl_forward.1} parent=1 // pred_check_branch
      %11 = sbr.rel (0) target = $region9
    $region8: #{fcl_forward.1} parent=1 // pred_region
      _
    $region9: #{fcl_forward.1} parent=1 // pred_fallthru
      _
    %v13 = vld [vmem:[%s0] sm:$0xf]
    %v14 = vld [vmem:[%s1] sm:$0xf]
    %v15 = vld [vmem:[%s1 + $0x4] sm:$0xf]
    %v18 = vunpack.c.l.b16 %v14
    %v19 = vunpack.c.l.b16 %v15
    %v20 = vpack.c.b16 %v19, %v18
    %vm21 = vcmask 261120
    %v23 = vsel %vm21, %v13, 0
    %v26 = vsel %vm21, %v20, 0
    %28 = vmatpush.bf16.xpose.msra.mxu0 0
    %29 = vmatpush.bf16.xpose.msra.mxu0 0
    %30 = vmatpush.bf16.xpose.msra.mxu0 0
    %31 = vmatpush.bf16.xpose.msra.mxu0 0
    %32 = vmatpush.bf16.xpose.msra.mxu0 0
    %33 = vmatpush.bf16.xpose.msra.mxu0 0
    %34 = vmatpush.bf16.xpose.msra.mxu0 0
    %35 = vmatpush.bf16.xpose.msra.mxu0 %v26
    %36 = vmatmul.bf16.gmra.mxu0 %v23
    %v37 = vpop.f32.mrf.mxu0
    %v38 = vadd.f32 0.0, %v37
    %v39 = vpop.f32.mrf.mxu0
    %40 = vdwg.mxu0
    %v41 = vxor.u32 %v38, 2147483648
    %v42 = vmul.f32 %v41, 1.442695
    %v43 = vpow.pop %v42
    %v44 = vadd.f32 %v43, 1.0
    %v45 = vrcp.pop %v44
    %v46 = vmul.f32 %v44, %v45
    %v47 = vsub.f32 1.0, %v46
    %v48 = vmul.f32 %v45, %v47
    %v49 = vadd.f32 %v45, %v48
    %vm50 = vweird.f32 %v44
    %vm51 = vweird.f32 %v45
    %vm52 = vmor %vm50, %vm51
    %v53 = vsel %vm52, %v45, %v49
    %v54 = vand.u32 2147483647, %v44
    %vm55 = vcmp.eq.f32.partialorder %v54, 8.507059e+37
    %v56 = vand.u32 %v44, 2147483648
    %v57 = vor.u32 1.1754944e-38, %v56
    %v58 = vsel %vm55, %v57, %v53
    %v59 = vmul.f32 1.0, %v58
    %vm60 = vcmask 130048
    %61 = vst.msk [vmem:[#allocation2] sm:$0xff] %vm60, %v59
    // Predicated region
    $region10: #{fcl_forward.1} parent=1 // pred_check
      _
    $region11: #{fcl_forward.1} parent=1 // pred_check_branch
      %63 = sbr.rel (0) target = $region13
    $region12: #{fcl_forward.1} parent=1 // pred_region
      %65 = vsyncadd [#allocation3], 0
      %s67 = sshll.u32 [#allocation2], 4
      %s68 = int_to_ptr.vmem [resolvable:$true] %s67
      %s69 = sshll.u32 %s2, 4
      %s70 = int_to_ptr.hbm [resolvable:$true] %s69
      %72 = dma.vmem_to_hbm [thread:$0]  %s68, 128, %s70, [#allocation3]
    $region13: #{fcl_forward.1} parent=1 // pred_fallthru
      _
    // Predicated region
    $region14: #{fcl_forward.1} parent=1 // pred_check
      _
    $region15: #{fcl_forward.1} parent=1 // pred_check_branch
      %74 = sbr.rel (0) target = $region17
    $region16: #{fcl_forward.1} parent=1 // pred_region
      %76 = dma.done [#allocation3], 128
    $region17: #{fcl_forward.1} parent=1 // pred_fallthru
      _
    %77 = vsyncpa [#allocation3], 1

</llo_original>
